<compile_context>
chip_gen: v6e
topology: v6e:2x2x1
jax: 0.10.0
libtpu: 0.0.40
codegen_flags: <defaults>
</compile_context>

<pallas_src>
import functools

import jax
import jax.numpy as jnp
from jax.experimental import pallas as pl
from jax.experimental.pallas import tpu as pltpu


# ----------------------------------------------------------------------------- #
# Generation-aware VMEM budget & tile caps
# ----------------------------------------------------------------------------- #
def _vmem_capacity_bytes():
    try:
        info = pltpu.get_tpu_info()
        cap = getattr(info, "vmem_capacity_bytes", None)
        if cap:
            return int(cap)
    except Exception:
        pass
    return 64 * 1024 * 1024   # conservative fallback (v7x per-TC physical)


_VMEM_CAP = _vmem_capacity_bytes()
_BIG_VMEM = _VMEM_CAP >= 100 * 1024 * 1024        # v5e / v6e (128 MiB)
_VMEM_LIMIT_BYTES = (96 if _BIG_VMEM else 48) * 1024 * 1024

_ROW_TILE_LN = 2048 if _BIG_VMEM else 1024        # pure streaming kernels
_ROW_TILE_MM = 512 if _BIG_VMEM else 256          # fused matmul kernels
_I_TILE = 1024 if _BIG_VMEM else 512              # FFN intermediate tile
_Q_TILE = 256                                     # attention query tile


def _compiler_params(sem):
    return pltpu.CompilerParams(
        dimension_semantics=tuple(sem),
        vmem_limit_bytes=_VMEM_LIMIT_BYTES,
    )


def _pick_tile(n, cap):
    # Largest "nice" tile <= cap that divides n (falls back to n itself).
    for t in (2048, 1024, 512, 256, 128, 64, 32, 16, 8):
        if t <= cap and n % t == 0:
            return t
    return n


def _full_spec(shape):
    nd = len(shape)
    return pl.BlockSpec(shape, lambda *_: (0,) * nd)


# ----------------------------------------------------------------------------- #
# In-kernel math helpers (f32)
# ----------------------------------------------------------------------------- #
def _gelu(x):
    # tanh approximation (EUP-friendly). ~1e-3 rel vs exact erf GELU.
    c = 0.7978845608028654  # sqrt(2/pi)
    return 0.5 * x * (1.0 + jnp.tanh(c * (x + 0.044715 * x * x * x)))


def _layernorm(t, g, b, eps):
    mean = jnp.mean(t, axis=-1, keepdims=True)
    var = jnp.mean(jnp.square(t - mean), axis=-1, keepdims=True)
    return (t - mean) * jax.lax.rsqrt(var + eps) * g + b


# ----------------------------------------------------------------------------- #
# Pallas kernels
# ----------------------------------------------------------------------------- #
def ln_kernel(x_ref, g_ref, b_ref, o_ref, *, eps):
    x = x_ref[...].astype(jnp.float32)
    o_ref[...] = _layernorm(x, g_ref[...], b_ref[...], eps).astype(o_ref.dtype)


def attn_kernel(hq_ref, hkv_ref, wq_ref, bq_ref, wkv_ref, bkv_ref, m_ref,
                o_ref, kv_ref, *, num_heads, head_dim, scale):
    # Grid (B, S//tq).  hq: (tq,H) bf16 query rows of this tile; hkv: (S,H) bf16
    # full sequence (re-DMA'd only when the batch index changes); wq/wkv resident
    # weight blocks.  K/V projection is computed once per batch (qi==0) into the
    # persistent kv scratch and reused by all query tiles of that batch.
    H = num_heads * head_dim
    qi = pl.program_id(1)

    @pl.when(qi == 0)
    def _():
        kv = jnp.dot(hkv_ref[...], wkv_ref[...],
                     preferred_element_type=jnp.float32) + bkv_ref[...]
        kv_ref[...] = kv.astype(kv_ref.dtype)

    # Fold 1/sqrt(Dh) into q (one (tq,H) multiply instead of per-head (tq,S)).
    q_all = (jnp.dot(hq_ref[...], wq_ref[...],
                     preferred_element_type=jnp.float32) + bq_ref[...]) * scale
    q_all = q_all.astype(jnp.bfloat16)            # (tq, H)
    neg = m_ref[...]                              # (1, S) additive mask
    kv = kv_ref[...]                              # (S, 2H) bf16 [K | V]

    ctx_heads = []
    for h in range(num_heads):
        q = q_all[:, h * head_dim:(h + 1) * head_dim]
        k = kv[:, h * head_dim:(h + 1) * head_dim]
        v = kv[:, H + h * head_dim:H + (h + 1) * head_dim]
        # QK^T without an explicit transpose: contract the last dim of both.
        s = jax.lax.dot_general(q, k, (((1,), (1,)), ((), ())),
                                preferred_element_type=jnp.float32)
        s = s + neg
        s = s - jnp.max(s, axis=-1, keepdims=True)
        p = jnp.exp(s)
        denom = jnp.sum(p, axis=-1, keepdims=True)
        p = p * pl.reciprocal(denom, approx=True)       # EUP reciprocal + bcast mul
        ctx_heads.append(jnp.dot(p.astype(jnp.bfloat16), v,
                                 preferred_element_type=jnp.float32))
    # Single lane-dense store of all heads in (tq, H) layout.
    o_ref[...] = jnp.concatenate(ctx_heads, axis=-1).astype(o_ref.dtype)


def out_adapter_ln_kernel(y_ref, res_ref, wof_ref, bof_ref, wu_ref, bu_ref,
                          g_ref, b_ref, o_ref, *, hidden, eps):
    # Attention output path, adapter down-proj folded into the dense:
    #   acc = ctx @ [wo | wo@wd] + [bo | bo@wd+bd]
    #   a = acc[:, :H]; h = gelu(acc[:, H:]) @ wu + bu; out = LN(a + h + residual)
    acc = jnp.dot(y_ref[...], wof_ref[...],
                  preferred_element_type=jnp.float32) + bof_ref[...]
    a = acc[:, :hidden]
    h = _gelu(acc[:, hidden:])
    h = jnp.dot(h.astype(jnp.bfloat16), wu_ref[...],
                preferred_element_type=jnp.float32) + bu_ref[...]
    t = a + h + res_ref[...].astype(jnp.float32)
    o_ref[...] = _layernorm(t, g_ref[...], b_ref[...], eps).astype(o_ref.dtype)


def ffn_adapter_ln_kernel(x_ref, wi_ref, bi_ref, wo2f_ref, bo2f_ref,
                          wu_ref, bu_ref, g_ref, b_ref, o_ref, acc_ref,
                          *, hidden, eps):
    # Grid (M//tm, I//ti), I axis "arbitrary".  Each step computes a (tm,ti)
    # chunk of gelu(x@wi) and accumulates its contribution to o/[adapter-down]
    # in the f32 VMEM accumulator; the full (tm,I) intermediate never exists.
    j = pl.program_id(1)

    @pl.when(j == 0)
    def _():
        acc_ref[...] = jnp.zeros_like(acc_ref)

    inter = jnp.dot(x_ref[...], wi_ref[...],
                    preferred_element_type=jnp.float32) + bi_ref[...]
    inter = _gelu(inter)
    acc_ref[...] += jnp.dot(inter.astype(jnp.bfloat16), wo2f_ref[...],
                            preferred_element_type=jnp.float32)

    @pl.when(j == pl.num_programs(1) - 1)
    def _():
        acc = acc_ref[...] + bo2f_ref[...]
        o = acc[:, :hidden]
        h = _gelu(acc[:, hidden:])
        h = jnp.dot(h.astype(jnp.bfloat16), wu_ref[...],
                    preferred_element_type=jnp.float32) + bu_ref[...]
        t = o + h + x_ref[...].astype(jnp.float32)
        o_ref[...] = _layernorm(t, g_ref[...], b_ref[...], eps).astype(o_ref.dtype)


# ----------------------------------------------------------------------------- #
# pallas_call wrappers
# ----------------------------------------------------------------------------- #
def pallas_ln(x2d, gamma, beta, eps):
    M, H = x2d.shape
    tm = _pick_tile(M, _ROW_TILE_LN)
    return pl.pallas_call(
        functools.partial(ln_kernel, eps=eps),
        grid=(M // tm,),
        in_specs=[pl.BlockSpec((tm, H), lambda i: (i, 0)),
                  _full_spec(gamma.shape), _full_spec(beta.shape)],
        out_specs=pl.BlockSpec((tm, H), lambda i: (i, 0)),
        out_shape=jax.ShapeDtypeStruct((M, H), jnp.bfloat16),
        compiler_params=_compiler_params(("parallel",)),
    )(x2d, gamma, beta)


def pallas_attention(hidden3, neg_mask, wq, bq, wkv, bkv, num_heads, head_dim, scale):
    B, S, H = hidden3.shape
    tq = _pick_tile(S, _Q_TILE)
    return pl.pallas_call(
        functools.partial(attn_kernel, num_heads=num_heads,
                          head_dim=head_dim, scale=scale),
        grid=(B, S // tq),
        in_specs=[pl.BlockSpec((None, tq, H), lambda b, q: (b, q, 0)),   # Q rows
                  pl.BlockSpec((None, S, H), lambda b, q: (b, 0, 0)),    # full seq for K/V
                  _full_spec(wq.shape), _full_spec(bq.shape),
                  _full_spec(wkv.shape), _full_spec(bkv.shape),
                  pl.BlockSpec((None, 1, S), lambda b, q: (b, 0, 0))],
        out_specs=pl.BlockSpec((None, tq, H), lambda b, q: (b, q, 0)),
        out_shape=jax.ShapeDtypeStruct((B, S, H), jnp.bfloat16),
        scratch_shapes=[pltpu.VMEM((S, 2 * H), jnp.bfloat16)],
        compiler_params=_compiler_params(("parallel", "arbitrary")),
    )(hidden3, hidden3, wq, bq, wkv, bkv, neg_mask)


def pallas_out_adapter_ln(y2d, res2d, wof, bof, wu, bu, gamma, beta, hidden, eps):
    M, H = res2d.shape
    tm = _pick_tile(M, _ROW_TILE_MM)
    return pl.pallas_call(
        functools.partial(out_adapter_ln_kernel, hidden=hidden, eps=eps),
        grid=(M // tm,),
        in_specs=[pl.BlockSpec((tm, H), lambda i: (i, 0)),
                  pl.BlockSpec((tm, H), lambda i: (i, 0)),
                  _full_spec(wof.shape), _full_spec(bof.shape),
                  _full_spec(wu.shape), _full_spec(bu.shape),
                  _full_spec(gamma.shape), _full_spec(beta.shape)],
        out_specs=pl.BlockSpec((tm, H), lambda i: (i, 0)),
        out_shape=jax.ShapeDtypeStruct((M, H), jnp.bfloat16),
        compiler_params=_compiler_params(("parallel",)),
    )(y2d, res2d, wof, bof, wu, bu, gamma, beta)


def pallas_ffn_adapter_ln(x2d, wi, bi, wo2f, bo2f, wu, bu, gamma, beta, hidden, eps):
    M, H = x2d.shape
    I = wi.shape[1]
    HA = wo2f.shape[1]
    tm = _pick_tile(M, _ROW_TILE_MM)
    ti = _pick_tile(I, _I_TILE)
    return pl.pallas_call(
        functools.partial(ffn_adapter_ln_kernel, hidden=hidden, eps=eps),
        grid=(M // tm, I // ti),
        in_specs=[pl.BlockSpec((tm, H), lambda i, j: (i, 0)),
                  pl.BlockSpec((H, ti), lambda i, j: (0, j)),
                  pl.BlockSpec((1, ti), lambda i, j: (0, j)),
                  pl.BlockSpec((ti, HA), lambda i, j: (j, 0)),
                  _full_spec(bo2f.shape),
                  _full_spec(wu.shape), _full_spec(bu.shape),
                  _full_spec(gamma.shape), _full_spec(beta.shape)],
        out_specs=pl.BlockSpec((tm, H), lambda i, j: (i, 0)),
        out_shape=jax.ShapeDtypeStruct((M, H), jnp.bfloat16),
        scratch_shapes=[pltpu.VMEM((tm, HA), jnp.float32)],
        compiler_params=_compiler_params(("parallel", "arbitrary")),
    )(x2d, wi, bi, wo2f, bo2f, wu, bu, gamma, beta)


# ----------------------------------------------------------------------------- #
# Parameters (synthetic, deterministic) and forward glue
# ----------------------------------------------------------------------------- #
def init_params(key, cfg):
    H, I, A = cfg["hidden"], cfg["inter"], cfg["adapter"]
    keys = iter(jax.random.split(key, 1024))

    def nrm(shape, std):
        return std * jax.random.normal(next(keys), shape, jnp.float32)

    zeros = lambda s: jnp.zeros(s, jnp.float32)
    ones = lambda s: jnp.ones(s, jnp.float32)
    bf = lambda a: a.astype(jnp.bfloat16)   # matmul weights bf16; biases/LN f32

    params = {
        "word_emb": nrm((cfg["vocab"], H), 0.02),
        "pos_emb": nrm((cfg["max_pos"], H), 0.02),
        "type_emb": nrm((2, H), 0.02),
        "emb_ln_g": ones((1, H)),
        "emb_ln_b": zeros((1, H)),
        "layers": [],
    }
    for _ in range(cfg["layers"]):
        wq, wk, wv = nrm((H, H), 0.02), nrm((H, H), 0.02), nrm((H, H), 0.02)
        bq, bk, bv = zeros((1, H)), zeros((1, H)), zeros((1, H))
        wo, bo = nrm((H, H), 0.02), zeros((1, H))
        a_wd, a_bd = nrm((H, A), 0.001), zeros((1, A))      # attention-path adapter
        a_wu, a_bu = nrm((A, H), 0.001), zeros((1, H))
        wi, bi = nrm((H, I), 0.02), zeros((1, I))
        wo2, bo2 = nrm((I, H), 0.02), zeros((1, H))
        f_wd, f_bd = nrm((H, A), 0.001), zeros((1, A))      # FFN-path adapter
        f_wu, f_bu = nrm((A, H), 0.001), zeros((1, H))

        # Fold adapter down-projection into the preceding dense (pre-GELU path
        # is linear).  Folds computed in f32, then stored bf16.
        wof = jnp.concatenate([wo, wo @ a_wd], axis=1)             # (H, H+A)
        bof = jnp.concatenate([bo, bo @ a_wd + a_bd], axis=1)      # (1, H+A)
        wo2f = jnp.concatenate([wo2, wo2 @ f_wd], axis=1)          # (I, H+A)
        bo2f = jnp.concatenate([bo2, bo2 @ f_wd + f_bd], axis=1)   # (1, H+A)

        params["layers"].append({
            "wq": bf(wq), "bq": bq,
            "wkv": bf(jnp.concatenate([wk, wv], axis=1)),
            "bkv": jnp.concatenate([bk, bv], axis=1),
            "wof": bf(wof), "bof": bof,
            "attn_ad_wu": bf(a_wu), "attn_ad_bu": a_bu,
            "attn_ln_g": ones((1, H)), "attn_ln_b": zeros((1, H)),
            "wi": bf(wi), "bi": bi,
            "wo2f": bf(wo2f), "bo2f": bo2f,
            "ffn_ad_wu": bf(f_wu), "ffn_ad_bu": f_bu,
            "out_ln_g": ones((1, H)), "out_ln_b": zeros((1, H)),
        })
    return params


def adapter_bert_forward(params, input_ids, mask, cfg):
    B, S = input_ids.shape
    H, nH = cfg["hidden"], cfg["heads"]
    Dh = H // nH
    eps = cfg["eps"]
    M = B * S

    # --- embeddings (gathers/adds are XLA glue; LayerNorm runs in Pallas) ---
    emb = params["word_emb"][input_ids]                                   # (B,S,H)
    emb = emb + params["pos_emb"][jnp.arange(S)][None, :, :]
    emb = emb + params["type_emb"][0][None, None, :]   # token_type_ids assumed zero
    hidden = pallas_ln(emb.reshape(M, H),
                       params["emb_ln_g"], params["emb_ln_b"], eps)       # (M,H) bf16

    # extended attention mask: (1 - mask) * -10000, shape (B, 1, S)
    neg_mask = ((1.0 - mask.astype(jnp.float32)) * -10000.0)[:, None, :]
    scale = 1.0 / (Dh ** 0.5)

    for lyr in params["layers"]:
        res2d = hidden
        # attention with fused QKV projection; per-batch K/V cached in VMEM.
        ctx = pallas_attention(hidden.reshape(B, S, H), neg_mask,
                               lyr["wq"], lyr["bq"], lyr["wkv"], lyr["bkv"],
                               nH, Dh, scale)
        ctx2d = ctx.reshape(M, H)                                          # bf16

        # AdapterBertOutput on attention: dense(+folded adapter-down) -> adapter-up
        # -> LN(x + residual), fused.
        attn_out = pallas_out_adapter_ln(
            ctx2d, res2d, lyr["wof"], lyr["bof"],
            lyr["attn_ad_wu"], lyr["attn_ad_bu"],
            lyr["attn_ln_g"], lyr["attn_ln_b"], H, eps)

        # FFN: intermediate(GELU, tiled over I) -> dense(+folded adapter-down)
        # -> adapter-up -> LN(x + residual), fused.
        hidden = pallas_ffn_adapter_ln(
            attn_out, lyr["wi"], lyr["bi"], lyr["wo2f"], lyr["bo2f"],
            lyr["ffn_ad_wu"], lyr["ffn_ad_bu"],
            lyr["out_ln_g"], lyr["out_ln_b"], H, eps)

    return hidden.reshape(B, S, H).astype(jnp.float32)


# ----------------------------------------------------------------------------- #
if __name__ == "__main__":
    cfg = dict(vocab=100, hidden=32, layers=2, heads=4, inter=64,
               max_pos=16, adapter=16, eps=1e-12)
    B, S = 2, 8

    key = jax.random.PRNGKey(0)
    k_params, k_ids = jax.random.split(key)
    params = init_params(k_params, cfg)

    input_ids = jax.random.randint(k_ids, (B, S), 0, cfg["vocab"], dtype=jnp.int32)
    mask = jnp.ones((B, S), jnp.float32).at[1, 6:].set(0.0)   # pad last 2 tokens of batch 1

    out = adapter_bert_forward(params, input_ids, mask, cfg)
    out = jax.block_until_ready(out)

    assert out.shape == (B, S, cfg["hidden"])
    assert bool(jnp.all(jnp.isfinite(out)))
    print("KERNEL_OK")
</pallas_src>

<mosaic_0001>
module attributes {stable_mosaic.version = 11 : i64} {
  func.func @ln_kernel(%arg0: i32, %arg1: memref<16x32xf32, #tpu.memory_space<vmem>>, %arg2: memref<1x32xf32, #tpu.memory_space<vmem>>, %arg3: memref<1x32xf32, #tpu.memory_space<vmem>>, %arg4: memref<16x32xbf16, #tpu.memory_space<vmem>>) attributes {dimension_semantics = [#tpu.dimension_semantics<parallel>], iteration_bounds = array<i64: 1>, scalar_prefetch = 0 : i64, scratch_operands = 0 : i64, tpu.core_type = #tpu.core_type<tc>, window_params = [{transform_indices = @transform_0, window_bounds = array<i64: 16, 32>}, {pipeline_mode = #tpu.pipeline_mode<synchronous>, transform_indices = @transform_1, window_bounds = array<i64: 1, 32>}, {pipeline_mode = #tpu.pipeline_mode<synchronous>, transform_indices = @transform_2, window_bounds = array<i64: 1, 32>}, {transform_indices = @transform_3, window_bounds = array<i64: 16, 32>}]} {
    %c0 = arith.constant 0 : index
    %c0_0 = arith.constant 0 : index
    %0 = vector.load %arg1[%c0, %c0_0] : memref<16x32xf32, #tpu.memory_space<vmem>>, vector<16x32xf32>
    %c0_1 = arith.constant 0 : index
    %c0_2 = arith.constant 0 : index
    %1 = vector.load %arg2[%c0_1, %c0_2] : memref<1x32xf32, #tpu.memory_space<vmem>>, vector<1x32xf32>
    %c0_3 = arith.constant 0 : index
    %c0_4 = arith.constant 0 : index
    %2 = vector.load %arg3[%c0_3, %c0_4] : memref<1x32xf32, #tpu.memory_space<vmem>>, vector<1x32xf32>
    %cst = arith.constant dense<0.000000e+00> : vector<16xf32>
    %3 = vector.multi_reduction <add>, %0, %cst [1] : vector<16x32xf32> to vector<16xf32>
    %4 = vector.shape_cast %3 : vector<16xf32> to vector<16x1xf32>
    %cst_5 = arith.constant 3.200000e+01 : f32
    %5 = vector.broadcast %cst_5 : f32 to vector<16x1xf32>
    %6 = arith.divf %4, %5 : vector<16x1xf32>
    %7 = vector.broadcast %6 : vector<16x1xf32> to vector<16x32xf32>
    %8 = arith.subf %0, %7 : vector<16x32xf32>
    %9 = arith.mulf %8, %8 : vector<16x32xf32>
    %cst_6 = arith.constant dense<0.000000e+00> : vector<16xf32>
    %10 = vector.multi_reduction <add>, %9, %cst_6 [1] : vector<16x32xf32> to vector<16xf32>
    %11 = vector.shape_cast %10 : vector<16xf32> to vector<16x1xf32>
    %cst_7 = arith.constant 3.200000e+01 : f32
    %12 = vector.broadcast %cst_7 : f32 to vector<16x1xf32>
    %13 = arith.divf %11, %12 : vector<16x1xf32>
    %14 = vector.broadcast %6 : vector<16x1xf32> to vector<16x32xf32>
    %15 = arith.subf %0, %14 : vector<16x32xf32>
    %cst_8 = arith.constant 9.99999996E-13 : f32
    %16 = vector.broadcast %cst_8 : f32 to vector<16x1xf32>
    %17 = arith.addf %13, %16 : vector<16x1xf32>
    %18 = math.rsqrt %17 : vector<16x1xf32>
    %19 = vector.broadcast %18 : vector<16x1xf32> to vector<16x32xf32>
    %20 = arith.mulf %15, %19 : vector<16x32xf32>
    %21 = vector.broadcast %1 : vector<1x32xf32> to vector<16x32xf32>
    %22 = arith.mulf %20, %21 : vector<16x32xf32>
    %23 = vector.broadcast %2 : vector<1x32xf32> to vector<16x32xf32>
    %24 = arith.addf %22, %23 : vector<16x32xf32>
    %25 = arith.truncf %24 : vector<16x32xf32> to vector<16x32xbf16>
    %c0_9 = arith.constant 0 : index
    %c0_10 = arith.constant 0 : index
    %26 = vector.load %arg4[%c0_9, %c0_10] : memref<16x32xbf16, #tpu.memory_space<vmem>>, vector<16x32xbf16>
    tpu.vector_store %arg4[%c0_9, %c0_10], %25 {strides = array<i32>} : memref<16x32xbf16, #tpu.memory_space<vmem>>, vector<16x32xbf16>,
    return
  }
  func.func @transform_0(%arg0: i32) -> (i32, i32) {
    %c0_i32 = arith.constant 0 : i32
    %c0_i32_0 = arith.constant 0 : i32
    return %arg0, %c0_i32 : i32, i32
  }
  func.func @transform_1(%arg0: i32) -> (i32, i32) {
    %c0_i32 = arith.constant 0 : i32
    %c0_i32_0 = arith.constant 0 : i32
    %c0_i32_1 = arith.constant 0 : i32
    return %c0_i32, %c0_i32_0 : i32, i32
  }
  func.func @transform_2(%arg0: i32) -> (i32, i32) {
    %c0_i32 = arith.constant 0 : i32
    %c0_i32_0 = arith.constant 0 : i32
    %c0_i32_1 = arith.constant 0 : i32
    return %c0_i32, %c0_i32_0 : i32, i32
  }
  func.func @transform_3(%arg0: i32) -> (i32, i32) {
    %c0_i32 = arith.constant 0 : i32
    %c0_i32_0 = arith.constant 0 : i32
    return %arg0, %c0_i32 : i32, i32
  }
}

</mosaic_0001>

<llo_original>
// kernel: tpu_custom_call.1
$region0: #{tpu_custom_call.1}
  #allocation0 [shape = 'u32[]', space=smem, size = 0x4, offset = 0x4, fixed_abs, tag = 'smem constant byte address 0x4 - core index']
  #allocation1 [shape = 'u32[144,128]{1,0:T(1,128)}', space=vmem, size = 0x12000, scoped, tag = 'internal scratch']
  %s0 = inlined_call_operand.hbm [shape: f32[16,32], index: 0, kind: input, shape index: {}]
  %s1 = inlined_call_operand.vmem [shape: f32[1,32], index: 1, kind: input, shape index: {}]
  %s2 = inlined_call_operand.vmem [shape: f32[1,32], index: 2, kind: input, shape index: {}]
  %s3 = inlined_call_operand.hbm [shape: bf16[16,32], index: 3, kind: output, shape index: {}]
  %s4 = sld [smem:[#allocation0]]
  $region26: #{tpu_custom_call.1} parent=0
    _
  %s6 = ssub.s32 1, %s4
  %s7 = scalar_select 0, %s6, %s4
  $region1: #{tpu_custom_call.1} parent=0
    #allocation2 [shape = 'u8[8192]{0}', space=vmem, size = 0x2000, scoped, tag = 'input window, operand 0, single buffered']
    #allocation3 [shape = 's32[1]{0}', space=sflag, size = 0x4, scoped, tag = 'scoped memory for tpu_custom_call.1']
    #allocation4 [shape = 's32[1]{0}', space=sflag, size = 0x4, scoped, tag = 'scoped memory for tpu_custom_call.1']
    #allocation5 [shape = 'u8[4096]{0}', space=vmem, size = 0x1000, scoped, tag = 'output window, operand 0, single buffered']
    %8 = vsyncpa [#allocation3], 0
    %9 = vsyncpa [#allocation4], 0
    // Predicated region
    $region2: #{tpu_custom_call.1} parent=1 // pred_check
      _
    $region3: #{tpu_custom_call.1} parent=1 // pred_check_branch
      %11 = sbr.rel (0) target = $region5
    $region4: #{tpu_custom_call.1} parent=1 // pred_region
      %s13 = ssub.s32 256, 256
      %14 = vsyncadd [#allocation3], %s13
      %s15 = sshll.u32 [#allocation2], 4
      %s16 = int_to_ptr.vmem [resolvable:$true] %s15
      %21 = dma.hbm_to_vmem [thread:$0]  %s0, 256, %s16, [#allocation3], 128, 128, 8
    $region5: #{tpu_custom_call.1} parent=1 // pred_fallthru
      _
    // Predicated region
    $region6: #{tpu_custom_call.1} parent=1 // pred_check
      _
    $region7: #{tpu_custom_call.1} parent=1 // pred_check_branch
      %23 = sbr.rel (0) target = $region9
    $region8: #{tpu_custom_call.1} parent=1 // pred_region
      _
    $region9: #{tpu_custom_call.1} parent=1 // pred_fallthru
      _
    // Predicated region
    $region10: #{tpu_custom_call.1} parent=1 // pred_check
      _
    $region11: #{tpu_custom_call.1} parent=1 // pred_check_branch
      %25 = sbr.rel (0) target = $region13
    $region12: #{tpu_custom_call.1} parent=1 // pred_region
      _
    $region13: #{tpu_custom_call.1} parent=1 // pred_fallthru
      _
    // Predicated region
    $region14: #{tpu_custom_call.1} parent=1 // pred_check
      _
    $region15: #{tpu_custom_call.1} parent=1 // pred_check_branch
      %27 = sbr.rel (0) target = $region17
    $region16: #{tpu_custom_call.1} parent=1 // pred_region
      %28 = dma.done [#allocation3], 256
    $region17: #{tpu_custom_call.1} parent=1 // pred_fallthru
      _
    %v29 = vld [vmem:[#allocation2] sm:$0xff]
    %v30 = vld [vmem:[#allocation2 + $0x8] sm:$0xff]
    %v31 = vld [vmem:[%s1] sm:$0x1]
    %v32 = vld [vmem:[%s2] sm:$0x1]
    %vm33 = vcmask 261120
    %v34 = vsel %vm33, %v29, 0.0
    %35 = vadd.xlane.f32.xlu0 %v34
    %v36 = vpop.xlane.xlu0 %35
    %v37 = vsel %vm33, %v30, 0.0
    %38 = vadd.xlane.f32.xlu0 %v37
    %v39 = vpop.xlane.xlu0 %38
    %v40 = vrcp.pop 32.0
    %v41 = vmul.f32 %v36, %v40
    %v42 = vmul.f32 %v39, %v40
    %v43 = vsub.f32 %v29, %v41
    %v44 = vsub.f32 %v30, %v42
    %v45 = vmul.f32 %v43, %v43
    %v46 = vmul.f32 %v44, %v44
    %v47 = vsel %vm33, %v45, 0.0
    %48 = vadd.xlane.f32.xlu0 %v47
    %v49 = vpop.xlane.xlu0 %48
    %v50 = vsel %vm33, %v46, 0.0
    %51 = vadd.xlane.f32.xlu0 %v50
    %v52 = vpop.xlane.xlu0 %51
    %v53 = vmul.f32 %v49, %v40
    %v54 = vmul.f32 %v52, %v40
    %v55 = vadd.f32 %v53, 1e-12
    %v56 = vadd.f32 %v54, 1e-12
    %v57 = vrsqrt.pop %v55
    %v58 = vrsqrt.pop %v56
    %v59 = vmul.f32 %v43, %v57
    %v60 = vmul.f32 %v44, %v58
    %v62 = vlaneseq
    %v63 = vshrl.u32 %v62, 7
    %v64 = vsub.s32 0, %v63
    %v65 = vrot.slane %v31, %v64
    %v67 = vmul.f32 %v59, %v65
    %v68 = vmul.f32 %v60, %v65
    %v70 = vlaneseq
    %v71 = vshrl.u32 %v70, 7
    %v72 = vsub.s32 0, %v71
    %v73 = vrot.slane %v32, %v72
    %v75 = vadd.f32 %v67, %v73
    %v76 = vadd.f32 %v68, %v73
    %v77 = vpack.c.bf16 %v76, %v75
    %v79 = vunpack.c.l.b16 %v77
    %v80 = vunpack.c.h.b16 %v77
    %v81 = vpack.c.b16 %v79, %v79
    %v82 = vpack.c.b16 %v80, %v80
    %vm85 = vcmask 257024
    %86 = vst.msk [vmem:[#allocation5] sm:$0xf] %vm85, %v81
    %87 = vst.msk [vmem:[#allocation5 + $0x4] sm:$0xf] %vm85, %v82
    // Predicated region
    $region18: #{tpu_custom_call.1} parent=1 // pred_check
      _
    $region19: #{tpu_custom_call.1} parent=1 // pred_check_branch
      %89 = sbr.rel (0) target = $region21
    $region20: #{tpu_custom_call.1} parent=1 // pred_region
      %s91 = ssub.s32 128, 128
      %92 = vsyncadd [#allocation4], %s91
      %s93 = sshll.u32 [#allocation5], 4
      %s94 = int_to_ptr.vmem [resolvable:$true] %s93
      %99 = dma.vmem_to_hbm [thread:$0]  %s94, 128, %s3, [#allocation4], 64, 64, 4
    $region21: #{tpu_custom_call.1} parent=1 // pred_fallthru
      _
    // Predicated region
    $region22: #{tpu_custom_call.1} parent=1 // pred_check
      _
    $region23: #{tpu_custom_call.1} parent=1 // pred_check_branch
      %101 = sbr.rel (0) target = $region25
    $region24: #{tpu_custom_call.1} parent=1 // pred_region
      %102 = dma.done [#allocation4], 128
    $region25: #{tpu_custom_call.1} parent=1 // pred_fallthru
      _
    %103 = vsyncpa [#allocation3], 1
    %104 = vsyncpa [#allocation4], 1

</llo_original>
